<compile_context>
chip_gen: v6e
topology: v6e:2x2x1
jax: 0.10.0
libtpu: 0.0.40
codegen_flags: <defaults>
</compile_context>

<pallas_src>
import functools

import jax
import jax.numpy as jnp
import numpy as np
from jax.experimental import pallas as pl
from jax.experimental.pallas import tpu as pltpu


def _round_up(x, m):
    return (x + m - 1) // m * m


@functools.lru_cache(maxsize=None)
def _argmax_lowering_supported():
    """Probe whether jnp.argmax(axis=-1) lowers inside a Pallas TPU kernel.

    The probe data contains ties so first-occurrence tie-breaking is verified too.
    """
    def probe(x_ref, o_ref):
        o_ref[...] = jnp.argmax(x_ref[...], axis=1, keepdims=True).astype(jnp.int32)

    try:
        row = jnp.arange(128, dtype=jnp.float32) % 7.0        # max 6, first at col 6
        x = jnp.tile(row[None, :], (8, 1))
        out = pl.pallas_call(
            probe, out_shape=jax.ShapeDtypeStruct((8, 1), jnp.int32)
        )(x)
        out = np.asarray(jax.block_until_ready(out))
        return bool((out[:, 0] == 6).all())
    except Exception:  # lowering unsupported on this jax/libtpu -> use fallback path
        return False


def _adj_topk_kernel(h_ref, out_ref, *, k, alpha, n_valid, tm, use_argmax):
    """One (tm, Npad) row tile of adj = relu(tanh(alpha * h h^T)) * topk_mask."""
    npad = h_ref.shape[0]
    row0 = pl.multiple_of(pl.program_id(0) * tm, tm)

    h_tile = h_ref[pl.ds(row0, tm), :]                     # (tm, D) sliced from resident h
    h_full = h_ref[...]                                    # (Npad, D)

    # a = h_tile @ h_full.T  (contract the feature dim of both; no transpose copy)
    a = jax.lax.dot_general(h_tile, h_full, (((1,), (1,)), ((), ())),
                            preferred_element_type=jnp.float32)
    adj = jnp.maximum(jnp.tanh(alpha * a), 0.0)            # (tm, Npad)

    neg_inf = jnp.float32(-jnp.inf)
    col = jax.lax.broadcasted_iota(jnp.int32, (1, npad), 1)  # (1, Npad) column ids

    # Exclude padded columns from the top-k competition.
    work = jnp.where(col < n_valid, adj, neg_inf)

    # Iterative top-k knock-out; k is a small compile-time constant -> fully unrolled.
    # Selected positions are exactly those driven to -inf (padded columns too, but their
    # adj is exactly 0, so the padded output stays 0).
    # TODO(synk): for k >~ 8, switch to lax.fori_loop(..., unroll=True) per review.
    for _ in range(k):
        if use_argmax:
            # Single fused XLU reduce; ties break to the lowest column index, matching
            # torch.topk / lax.top_k first-occurrence behaviour.
            sel = jnp.argmax(work, axis=1, keepdims=True)                 # (tm, 1)
        else:
            row_max = jnp.max(work, axis=1, keepdims=True)                # (tm, 1)
            sel = jnp.min(jnp.where(work == row_max, col, npad),
                          axis=1, keepdims=True)                          # (tm, 1)
        work = jnp.where(col == sel, neg_inf, work)

    out_ref[...] = jnp.where(work == neg_inf, adj, 0.0)


def _pick_tile(npad, d):
    """Row-tile size + optional scoped-VMEM override, budgeted per TPU generation.

    Per grid step the kernel holds the output double buffer (2 x tm x Npad x 4 B), the
    two live f32 temporaries adj/work (2 x tm x Npad x 4 B) and the (double-buffered)
    resident h block.  A ~12 MiB target fits every generation's default scoped VMEM
    (v5e 16 MiB, v6e/v7x 32 MiB) with headroom.
    """
    def est_bytes(tm):
        return 4 * tm * npad * 4 + 2 * npad * d * 4

    budget = 12 * 1024 * 1024
    tm = 256
    while tm > max(npad // 2, 32):          # >= 2 row tiles so "parallel" spans both TCs
        tm //= 2
    while tm > 32 and est_bytes(tm) > budget:
        tm //= 2
    while npad % tm:                        # npad is a multiple of 128, tm a power of two
        tm //= 2
    vmem_limit = None
    if est_bytes(tm) > budget:
        # Very large N even at tm=32: raise the scoped limit (stay below v7x 64 MiB VMEM).
        vmem_limit = int(min(est_bytes(tm) + (8 << 20), 56 << 20))
    return tm, vmem_limit


def graph_undirected_forward(idx, emb_table, lin_w, lin_b, *, k, alpha):
    """idx: (N,) int node indices. Returns the (N, N) top-k-per-row sparse adjacency."""
    nodevec = emb_table[idx].astype(jnp.float32)            # embedding gather (glue)
    n, d = nodevec.shape

    # h = tanh(alpha * lin1(nodevec)): tiny matmul, kept in plain XLA (per perf review).
    h = jnp.tanh(alpha * (nodevec @ lin_w.T.astype(jnp.float32)
                          + lin_b.astype(jnp.float32)))      # (N, d)

    npad = _round_up(max(n, 128), 128)                        # lane-dense rows/cols
    tm, vmem_limit = _pick_tile(npad, d)

    if npad == n:
        h_pad = h                                             # already aligned: no pad copy
    else:
        h_pad = jnp.zeros((npad, d), jnp.float32).at[:n, :].set(h)   # padded rows == 0

    kernel = functools.partial(
        _adj_topk_kernel, k=int(k), alpha=float(alpha), n_valid=n, tm=tm,
        use_argmax=_argmax_lowering_supported())

    adj_pad = pl.pallas_call(
        kernel,
        out_shape=jax.ShapeDtypeStruct((npad, npad), jnp.float32),
        grid=(npad // tm,),
        in_specs=[
            # Resident h block: constant index map -> fetched once, stays in VMEM.
            pl.BlockSpec((npad, d), lambda i: (0, 0)),
        ],
        out_specs=pl.BlockSpec((tm, npad), lambda i: (i, 0)),  # lane-dense output tile
        compiler_params=pltpu.CompilerParams(
            dimension_semantics=("parallel",),
            vmem_limit_bytes=vmem_limit),
    )(h_pad)

    if npad == n:
        return adj_pad                                        # skip the pure-HBM slice copy
    return adj_pad[:n, :n]


def _reference(idx, emb_table, lin_w, lin_b, *, k, alpha):
    nv = emb_table[idx]
    h = jnp.tanh(alpha * (nv @ lin_w.T + lin_b))
    a = h @ h.T
    adj = jax.nn.relu(jnp.tanh(alpha * a))
    _, inds = jax.lax.top_k(adj, k)
    n = adj.shape[0]
    mask = jnp.zeros_like(adj).at[jnp.arange(n)[:, None], inds].set(1.0)
    return adj * mask


if __name__ == "__main__":
    # Module hyper-params (small, synthetic): nnodes=20, dim=32, k=3, alpha=3.
    nnodes, dim, k, alpha = 20, 32, 3, 3.0
    n_idx = 8                                                 # idx batch of 8 nodes

    key = jax.random.PRNGKey(0)
    k_emb, k_w, k_b = jax.random.split(key, 3)
    emb_table = jax.random.normal(k_emb, (nnodes, dim), dtype=jnp.float32) * 0.5
    lin_w = jax.random.normal(k_w, (dim, dim), dtype=jnp.float32) * (1.0 / jnp.sqrt(dim))
    lin_b = jax.random.normal(k_b, (dim,), dtype=jnp.float32) * 0.1
    idx = jnp.arange(n_idx, dtype=jnp.int32)

    out = graph_undirected_forward(idx, emb_table, lin_w, lin_b, k=k, alpha=alpha)
    out = jax.block_until_ready(out)

    ref = _reference(idx, emb_table, lin_w, lin_b, k=k, alpha=alpha)
    np.testing.assert_allclose(np.asarray(out), np.asarray(ref), rtol=1e-5, atol=1e-5)
    assert out.shape == (n_idx, n_idx)

    print("KERNEL_OK")
</pallas_src>

<mosaic_0001>
module attributes {stable_mosaic.version = 11 : i64} {
  func.func @probe(%arg0: memref<8x128xf32, #tpu.memory_space<vmem>>, %arg1: memref<8x1xi32, #tpu.memory_space<vmem>>) attributes {dimension_semantics = [], scalar_prefetch = 0 : i64, scratch_operands = 0 : i64, tpu.core_type = #tpu.core_type<tc>} {
    %c0 = arith.constant 0 : index
    %c0_0 = arith.constant 0 : index
    %0 = vector.load %arg0[%c0, %c0_0] : memref<8x128xf32, #tpu.memory_space<vmem>>, vector<8x128xf32>
    %1 = tpu.reduce_index %0 {axis = 1 : i32, kind = #tpu.reduction_kind<arg_max>} : vector<8x128xf32> -> vector<8xi32>
    %2 = vector.shape_cast %1 : vector<8xi32> to vector<8x1xi32>
    %c0_1 = arith.constant 0 : index
    %c0_2 = arith.constant 0 : index
    %3 = vector.load %arg1[%c0_1, %c0_2] : memref<8x1xi32, #tpu.memory_space<vmem>>, vector<8x1xi32>
    tpu.vector_store %arg1[%c0_1, %c0_2], %2 {strides = array<i32>} : memref<8x1xi32, #tpu.memory_space<vmem>>, vector<8x1xi32>,
    return
  }
}

module attributes {stable_mosaic.version = 11 : i64} {
  func.func @_adj_topk_kernel(%arg0: i32, %arg1: memref<128x32xf32, #tpu.memory_space<vmem>>, %arg2: memref<64x128xf32, #tpu.memory_space<vmem>>) attributes {dimension_semantics = [#tpu.dimension_semantics<parallel>], iteration_bounds = array<i64: 2>, scalar_prefetch = 0 : i64, scratch_operands = 0 : i64, tpu.core_type = #tpu.core_type<tc>, window_params = [{pipeline_mode = #tpu.pipeline_mode<synchronous>, transform_indices = @transform_0, window_bounds = array<i64: 128, 32>}, {transform_indices = @transform_1, window_bounds = array<i64: 64, 128>}]} {
    %c64_i32 = arith.constant 64 : i32
    %0 = arith.muli %arg0, %c64_i32 : i32
    %1 = tpu.assume_multiple %0, 64 : i32
    %2 = arith.index_cast %1 : i32 to index
    %c0 = arith.constant 0 : index
    %3 = vector.load %arg1[%2, %c0] : memref<128x32xf32, #tpu.memory_space<vmem>>, vector<64x32xf32>
    %c0_0 = arith.constant 0 : index
    %c0_1 = arith.constant 0 : index
    %4 = vector.load %arg1[%c0_0, %c0_1] : memref<128x32xf32, #tpu.memory_space<vmem>>, vector<128x32xf32>
    %cst = arith.constant dense<0.000000e+00> : vector<64x128xf32>
    %5 = tpu.matmul %3, %4, %cst {dimension_numbers = #tpu.dot_dimension_numbers<[1], [1], [0], [0], [0, 0, 1, 0], [], []>} : vector<64x32xf32>, vector<128x32xf32>, vector<64x128xf32> -> vector<64x128xf32>
    %cst_2 = arith.constant 3.000000e+00 : f32
    %6 = vector.broadcast %cst_2 : f32 to vector<64x128xf32>
    %7 = arith.mulf %6, %5 : vector<64x128xf32>
    %8 = math.tanh %7 : vector<64x128xf32>
    %cst_3 = arith.constant 0.000000e+00 : f32
    %9 = vector.broadcast %cst_3 : f32 to vector<64x128xf32>
    %10 = arith.maximumf %8, %9 : vector<64x128xf32>
    %11 = tpu.iota {dimensions = array<i32: 1>} : vector<1x128xi32>
    %c8_i32 = arith.constant 8 : i32
    %12 = vector.broadcast %c8_i32 : i32 to vector<1x128xi32>
    %13 = arith.cmpi slt, %11, %12 : vector<1x128xi32>
    %cst_4 = arith.constant 0xFF800000 : f32
    %14 = vector.shape_cast %13 : vector<1x128xi1> to vector<1x128xi1>
    %15 = vector.broadcast %14 : vector<1x128xi1> to vector<64x128xi1>
    %16 = vector.broadcast %cst_4 : f32 to vector<64x128xf32>
    %17 = arith.select %15, %10, %16 : vector<64x128xi1>, vector<64x128xf32>
    %cst_5 = arith.constant dense<0xFF800000> : vector<64xf32>
    %18 = vector.multi_reduction <maximumf>, %17, %cst_5 [1] : vector<64x128xf32> to vector<64xf32>
    %19 = vector.shape_cast %18 : vector<64xf32> to vector<64x1xf32>
    %20 = vector.broadcast %19 : vector<64x1xf32> to vector<64x128xf32>
    %21 = arith.cmpf oeq, %17, %20 : vector<64x128xf32>
    %c128_i32 = arith.constant 128 : i32
    %22 = vector.shape_cast %11 : vector<1x128xi32> to vector<1x128xi32>
    %23 = vector.broadcast %22 : vector<1x128xi32> to vector<64x128xi32>
    %24 = vector.broadcast %c128_i32 : i32 to vector<64x128xi32>
    %25 = arith.select %21, %23, %24 : vector<64x128xi1>, vector<64x128xi32>
    %cst_6 = arith.constant dense<2147483647> : vector<64xi32>
    %26 = vector.multi_reduction <minsi>, %25, %cst_6 [1] : vector<64x128xi32> to vector<64xi32>
    %27 = vector.shape_cast %26 : vector<64xi32> to vector<64x1xi32>
    %28 = vector.broadcast %11 : vector<1x128xi32> to vector<64x128xi32>
    %29 = vector.broadcast %27 : vector<64x1xi32> to vector<64x128xi32>
    %30 = arith.cmpi eq, %28, %29 : vector<64x128xi32>
    %cst_7 = arith.constant 0xFF800000 : f32
    %31 = vector.broadcast %cst_7 : f32 to vector<64x128xf32>
    %32 = arith.select %30, %31, %17 : vector<64x128xi1>, vector<64x128xf32>
    %cst_8 = arith.constant dense<0xFF800000> : vector<64xf32>
    %33 = vector.multi_reduction <maximumf>, %32, %cst_8 [1] : vector<64x128xf32> to vector<64xf32>
    %34 = vector.shape_cast %33 : vector<64xf32> to vector<64x1xf32>
    %35 = vector.broadcast %34 : vector<64x1xf32> to vector<64x128xf32>
    %36 = arith.cmpf oeq, %32, %35 : vector<64x128xf32>
    %c128_i32_9 = arith.constant 128 : i32
    %37 = vector.shape_cast %11 : vector<1x128xi32> to vector<1x128xi32>
    %38 = vector.broadcast %37 : vector<1x128xi32> to vector<64x128xi32>
    %39 = vector.broadcast %c128_i32_9 : i32 to vector<64x128xi32>
    %40 = arith.select %36, %38, %39 : vector<64x128xi1>, vector<64x128xi32>
    %cst_10 = arith.constant dense<2147483647> : vector<64xi32>
    %41 = vector.multi_reduction <minsi>, %40, %cst_10 [1] : vector<64x128xi32> to vector<64xi32>
    %42 = vector.shape_cast %41 : vector<64xi32> to vector<64x1xi32>
    %43 = vector.broadcast %11 : vector<1x128xi32> to vector<64x128xi32>
    %44 = vector.broadcast %42 : vector<64x1xi32> to vector<64x128xi32>
    %45 = arith.cmpi eq, %43, %44 : vector<64x128xi32>
    %cst_11 = arith.constant 0xFF800000 : f32
    %46 = vector.broadcast %cst_11 : f32 to vector<64x128xf32>
    %47 = arith.select %45, %46, %32 : vector<64x128xi1>, vector<64x128xf32>
    %cst_12 = arith.constant dense<0xFF800000> : vector<64xf32>
    %48 = vector.multi_reduction <maximumf>, %47, %cst_12 [1] : vector<64x128xf32> to vector<64xf32>
    %49 = vector.shape_cast %48 : vector<64xf32> to vector<64x1xf32>
    %50 = vector.broadcast %49 : vector<64x1xf32> to vector<64x128xf32>
    %51 = arith.cmpf oeq, %47, %50 : vector<64x128xf32>
    %c128_i32_13 = arith.constant 128 : i32
    %52 = vector.shape_cast %11 : vector<1x128xi32> to vector<1x128xi32>
    %53 = vector.broadcast %52 : vector<1x128xi32> to vector<64x128xi32>
    %54 = vector.broadcast %c128_i32_13 : i32 to vector<64x128xi32>
    %55 = arith.select %51, %53, %54 : vector<64x128xi1>, vector<64x128xi32>
    %cst_14 = arith.constant dense<2147483647> : vector<64xi32>
    %56 = vector.multi_reduction <minsi>, %55, %cst_14 [1] : vector<64x128xi32> to vector<64xi32>
    %57 = vector.shape_cast %56 : vector<64xi32> to vector<64x1xi32>
    %58 = vector.broadcast %11 : vector<1x128xi32> to vector<64x128xi32>
    %59 = vector.broadcast %57 : vector<64x1xi32> to vector<64x128xi32>
    %60 = arith.cmpi eq, %58, %59 : vector<64x128xi32>
    %cst_15 = arith.constant 0xFF800000 : f32
    %61 = vector.broadcast %cst_15 : f32 to vector<64x128xf32>
    %62 = arith.select %60, %61, %47 : vector<64x128xi1>, vector<64x128xf32>
    %cst_16 = arith.constant 0xFF800000 : f32
    %63 = vector.broadcast %cst_16 : f32 to vector<64x128xf32>
    %64 = arith.cmpf oeq, %62, %63 : vector<64x128xf32>
    %cst_17 = arith.constant 0.000000e+00 : f32
    %65 = vector.broadcast %cst_17 : f32 to vector<64x128xf32>
    %66 = arith.select %64, %10, %65 : vector<64x128xi1>, vector<64x128xf32>
    %c0_18 = arith.constant 0 : index
    %c0_19 = arith.constant 0 : index
    %67 = vector.load %arg2[%c0_18, %c0_19] : memref<64x128xf32, #tpu.memory_space<vmem>>, vector<64x128xf32>
    tpu.vector_store %arg2[%c0_18, %c0_19], %66 {strides = array<i32>} : memref<64x128xf32, #tpu.memory_space<vmem>>, vector<64x128xf32>,
    return
  }
  func.func @transform_0(%arg0: i32) -> (i32, i32) {
    %c0_i32 = arith.constant 0 : i32
    %c0_i32_0 = arith.constant 0 : i32
    %c0_i32_1 = arith.constant 0 : i32
    return %c0_i32, %c0_i32_0 : i32, i32
  }
  func.func @transform_1(%arg0: i32) -> (i32, i32) {
    %c0_i32 = arith.constant 0 : i32
    %c0_i32_0 = arith.constant 0 : i32
    return %arg0, %c0_i32 : i32, i32
  }
}

</mosaic_0001>

<llo_original>
// kernel: tpu_custom_call.1
$region0: #{tpu_custom_call.1}
  #allocation0 [shape = 'u32[]', space=smem, size = 0x4, offset = 0x4, fixed_abs, tag = 'smem constant byte address 0x4 - core index']
  #allocation1 [shape = 'u32[144,128]{1,0:T(1,128)}', space=vmem, size = 0x12000, scoped, tag = 'internal scratch']
  %s0 = inlined_call_operand.hbm [shape: f32[8,128], index: 0, kind: input, shape index: {}]
  %s1 = inlined_call_operand.vmem [shape: s32[8,1], index: 1, kind: output, shape index: {}]
  %s2 = sld [smem:[#allocation0]]
  $region18: #{tpu_custom_call.1} parent=0
    _
  %s4 = ssub.s32 1, %s2
  %s5 = scalar_select 0, %s4, %s2
  $region1: #{tpu_custom_call.1} parent=0
    #allocation2 [shape = 'u8[4096]{0}', space=vmem, size = 0x1000, scoped, tag = 'input window, operand 0, single buffered']
    #allocation3 [shape = 's32[1]{0}', space=sflag, size = 0x4, scoped, tag = 'scoped memory for tpu_custom_call.1']
    %6 = vsyncpa [#allocation3], 0
    // Predicated region
    $region2: #{tpu_custom_call.1} parent=1 // pred_check
      _
    $region3: #{tpu_custom_call.1} parent=1 // pred_check_branch
      %8 = sbr.rel (0) target = $region5
    $region4: #{tpu_custom_call.1} parent=1 // pred_region
      %s10 = ssub.s32 128, 128
      %11 = vsyncadd [#allocation3], %s10
      %s13 = sshll.u32 [#allocation2], 4
      %s14 = int_to_ptr.vmem [resolvable:$true] %s13
      %16 = dma.hbm_to_vmem [thread:$0]  %s0, 128, %s14, [#allocation3]
    $region5: #{tpu_custom_call.1} parent=1 // pred_fallthru
      _
    // Predicated region
    $region6: #{tpu_custom_call.1} parent=1 // pred_check
      _
    $region7: #{tpu_custom_call.1} parent=1 // pred_check_branch
      %18 = sbr.rel (0) target = $region9
    $region8: #{tpu_custom_call.1} parent=1 // pred_region
      %19 = dma.done [#allocation3], 128
    $region9: #{tpu_custom_call.1} parent=1 // pred_fallthru
      _
    %v20 = vld [vmem:[#allocation2] sm:$0xff]
    %21 = vmax.index.xlane.f32.xlu0 %v20
    %v22 = vpop.xlane.xlu0 %21
    %vm23 = vcmask 7168
    %24 = vst.msk [vmem:[%s1] sm:$0xff] %vm23, %v22
    // Predicated region
    $region10: #{tpu_custom_call.1} parent=1 // pred_check
      _
    $region11: #{tpu_custom_call.1} parent=1 // pred_check_branch
      %26 = sbr.rel (0) target = $region13
    $region12: #{tpu_custom_call.1} parent=1 // pred_region
      _
    $region13: #{tpu_custom_call.1} parent=1 // pred_fallthru
      _
    // Predicated region
    $region14: #{tpu_custom_call.1} parent=1 // pred_check
      _
    $region15: #{tpu_custom_call.1} parent=1 // pred_check_branch
      %28 = sbr.rel (0) target = $region17
    $region16: #{tpu_custom_call.1} parent=1 // pred_region
      _
    $region17: #{tpu_custom_call.1} parent=1 // pred_fallthru
      _
    %29 = vsyncpa [#allocation3], 1

// kernel: tpu_custom_call.1
$region0: #{tpu_custom_call.1}
  #allocation0 [shape = 'u32[]', space=smem, size = 0x4, offset = 0x4, fixed_abs, tag = 'smem constant byte address 0x4 - core index']
  #allocation1 [shape = 'u32[144,128]{1,0:T(1,128)}', space=vmem, size = 0x12000, scoped, tag = 'internal scratch']
  %s0 = inlined_call_operand.vmem [shape: f32[128,32], index: 0, kind: input, shape index: {}]
  %s1 = inlined_call_operand.hbm [shape: f32[128,128], index: 1, kind: output, shape index: {}]
  %s2 = sld [smem:[#allocation0]]
  $region37: #{tpu_custom_call.1} parent=0
    _
  %s4 = ssub.s32 1, %s2
  %s5 = scalar_select 0, %s4, %s2
  $region1: #{tpu_custom_call.1} parent=0
    #allocation2 [shape = 'u8[65536]{0}', space=vmem, size = 0x10000, scoped, tag = 'output window, operand 0']
    #allocation3 [shape = 's32[2]{0}', space=sflag, size = 0x8, scoped, tag = 'scoped memory for tpu_custom_call.1']
    %6 = vsyncpa [#allocation3], 0
    %s7 = scalar_lea.sflag [#allocation3], 1
    %8 = vsyncpa %s7, 0
    loop: start=0, step=1, limit=4
    $region2: #{tpu_custom_call.1} parent=1 // loop_pre_header
      _
    $region3: #{tpu_custom_call.1} parent=1 // loop_header
      %s10 = sphi 0, %s14
      %p11 = scmp.ge.s32.totalorder %s10, 4
      %s18 = sphi 0, %s18
      %s20 = sphi 0, %s18
      %s21 = sphi 0, %s20
      %s35 = sphi 0, %s21
      %s41 = sphi 0, %s43
      %s44 = sphi 0, %s41
      %s45 = sphi 0, %s44
      %s61 = sphi 0, %s45
    $region4: #{tpu_custom_call.1} parent=1 // loop_header_branch
      %13 = sbr.rel (%p11) target = $region8
    $region5: #{tpu_custom_call.1} parent=1 // loop_body
      %s15 = ssub.s32 %s10, 1
      %s16 = ssub.s32 %s10, 2
      %s17 = sadd.s32 %s10, 1
      %s19 = sadd.s32 %s18, 1
      %p22 = scmp.eq.s32.totalorder %s10, 1
      %p23 = scmp.ne.s32.totalorder %s18, %s20
      %p24 = scmp.eq.s32.totalorder %s10, 0
      %p25 = por %p23, %p24
      %p26 = scmp.ne.s32.totalorder %s18, %s20
      %p27 = scmp.eq.s32.totalorder %s15, 1
      %p28 = por %p26, %p27
      %p29 = scmp.ne.s32.totalorder %s20, %s21
      %p30 = scmp.eq.s32.totalorder %s15, 0
      %p31 = por %p29, %p30
      %p32 = scmp.ne.s32.totalorder %s20, %s21
      %p33 = scmp.eq.s32.totalorder %s16, 1
      %p34 = por %p32, %p33
      %p36 = scmp.ne.s32.totalorder %s21, %s35
      %p37 = scmp.eq.s32.totalorder %s16, 0
      %p38 = por %p36, %p37
      %s39 = ssub.s32 %s10, %s17
      %p40 = scmp.eq.s32.totalorder %s39, 0
      %s42 = sadd.s32 %s41, 1
      %s43 = scalar_select %p40, %s41, %s42
      %p46 = pneg %p40
      %p47 = scmp.eq.s32.totalorder %s10, 1
      %p48 = por %p46, %p47
      %p49 = scmp.ne.s32.totalorder %s41, %s44
      %p50 = scmp.eq.s32.totalorder %s10, 0
      %p51 = por %p49, %p50
      %p52 = scmp.ne.s32.totalorder %s41, %s44
      %p53 = scmp.eq.s32.totalorder %s15, 1
      %p54 = por %p52, %p53
      %p55 = scmp.ne.s32.totalorder %s44, %s45
      %p56 = scmp.eq.s32.totalorder %s15, 0
      %p57 = por %p55, %p56
      %p58 = scmp.ne.s32.totalorder %s44, %s45
      %p59 = scmp.eq.s32.totalorder %s16, 1
      %p60 = por %p58, %p59
      %p62 = scmp.ne.s32.totalorder %s45, %s61
      %p63 = scmp.eq.s32.totalorder %s16, 0
      %p64 = por %p62, %p63
      %p65 = scmp.le.s32.totalorder 1, %s10
      %p66 = scmp.lt.s32.totalorder %s10, 3
      %p67 = pnand %p65, %p66
      %p68 = pneg %p67
      // Predicated region
      $region9: #{tpu_custom_call.1} parent=5 // pred_check
        _
      $region10: #{tpu_custom_call.1} parent=5 // pred_check_branch
        %70 = sbr.rel (%p67) target = $region12
      $region11: #{tpu_custom_call.1} parent=5 // pred_region
        %s71 = ssub.s32 %s10, 1
        // Predicated region
        $region13: #{tpu_custom_call.1} parent=11 // pred_check
          %p72 = pneg %p31
        $region14: #{tpu_custom_call.1} parent=11 // pred_check_branch
          %74 = sbr.rel (%p72) target = $region16
        $region15: #{tpu_custom_call.1} parent=11 // pred_region
          _
        $region16: #{tpu_custom_call.1} parent=11 // pred_fallthru
          _
      $region12: #{tpu_custom_call.1} parent=5 // pred_fallthru
        _
      %p75 = scmp.lt.s32.totalorder %s10, 2
      // Predicated region
      $region17: #{tpu_custom_call.1} parent=5 // pred_check
        %p76 = pneg %p75
      $region18: #{tpu_custom_call.1} parent=5 // pred_check_branch
        %78 = sbr.rel (%p76) target = $region20
      $region19: #{tpu_custom_call.1} parent=5 // pred_region
        _
      $region20: #{tpu_custom_call.1} parent=5 // pred_fallthru
        _
      %p79 = scmp.le.s32.totalorder 1, %s10
      %p80 = scmp.lt.s32.totalorder %s10, 3
      %p81 = pnand %p79, %p80
      %p82 = pneg %p81
      // Predicated region
      $region21: #{tpu_custom_call.1} parent=5 // pred_check
        _
      $region22: #{tpu_custom_call.1} parent=5 // pred_check_branch
        %84 = sbr.rel (%p81) target = $region24
      $region23: #{tpu_custom_call.1} parent=5 // pred_region
        %s85 = ssub.s32 %s10, 1
        %p86 = pneg %p31
        %p87 = pneg %p28
        %p88 = pneg %p57
        %p89 = pneg %p54
        %s90 = sand.u32 %s44, 1
        %s91 = scalar_lea.sflag [#allocation3], %s90
        %s92 = sand.u32 %s44, 1
        %s93 = smul.addr %s92, 64
        %s94 = scalar_lea.vmem [#allocation2], %s93
        %s95 = smul.u32 8, %s15
        %s96 = smul.u32 %s15, 64
        %s97 = scalar_lea.vmem %s0, %s96
        %v98 = vld [vmem:[%s97] sm:$0xff]
        %v99 = vld [vmem:[%s97 + $0x8] sm:$0xff]
        %v100 = vld [vmem:[%s97 + $0x10] sm:$0xff]
        %v101 = vld [vmem:[%s97 + $0x18] sm:$0xff]
        %v102 = vld [vmem:[%s97 + $0x20] sm:$0xff]
        %v103 = vld [vmem:[%s97 + $0x28] sm:$0xff]
        %v104 = vld [vmem:[%s97 + $0x30] sm:$0xff]
        %v105 = vld [vmem:[%s97 + $0x38] sm:$0xff]
        %v106 = vld [vmem:[%s0] sm:$0xff]
        %v107 = vld [vmem:[%s0 + $0x8] sm:$0xff]
        %v108 = vld [vmem:[%s0 + $0x10] sm:$0xff]
        %v109 = vld [vmem:[%s0 + $0x18] sm:$0xff]
        %v110 = vld [vmem:[%s0 + $0x20] sm:$0xff]
        %v111 = vld [vmem:[%s0 + $0x28] sm:$0xff]
        %v112 = vld [vmem:[%s0 + $0x30] sm:$0xff]
        %v113 = vld [vmem:[%s0 + $0x38] sm:$0xff]
        %v114 = vld [vmem:[%s0 + $0x40] sm:$0xff]
        %v115 = vld [vmem:[%s0 + $0x48] sm:$0xff]
        %v116 = vld [vmem:[%s0 + $0x50] sm:$0xff]
        %v117 = vld [vmem:[%s0 + $0x58] sm:$0xff]
        %v118 = vld [vmem:[%s0 + $0x60] sm:$0xff]
        %v119 = vld [vmem:[%s0 + $0x68] sm:$0xff]
        %v120 = vld [vmem:[%s0 + $0x70] sm:$0xff]
        %v121 = vld [vmem:[%s0 + $0x78] sm:$0xff]
        %vm122 = vcmask 261120
        %v124 = vsel %vm122, %v98, 0
        %v127 = vsel %vm122, %v99, 0
        %v130 = vsel %vm122, %v100, 0
        %v133 = vsel %vm122, %v101, 0
        %v136 = vsel %vm122, %v102, 0
        %v139 = vsel %vm122, %v103, 0
        %v142 = vsel %vm122, %v104, 0
        %v145 = vsel %vm122, %v105, 0
        %v148 = vsel %vm122, %v106, 0
        %v151 = vsel %vm122, %v107, 0
        %v154 = vsel %vm122, %v108, 0
        %v157 = vsel %vm122, %v109, 0
        %v160 = vsel %vm122, %v110, 0
        %v163 = vsel %vm122, %v111, 0
        %v166 = vsel %vm122, %v112, 0
        %v169 = vsel %vm122, %v113, 0
        %v172 = vsel %vm122, %v114, 0
        %v175 = vsel %vm122, %v115, 0
        %v178 = vsel %vm122, %v116, 0
        %v181 = vsel %vm122, %v117, 0
        %v184 = vsel %vm122, %v118, 0
        %v187 = vsel %vm122, %v119, 0
        %v190 = vsel %vm122, %v120, 0
        %v193 = vsel %vm122, %v121, 0
        %195 = vmatprep.subr.mxu0 0.0
        %196 = vmatpush1.xpose.msra.mxu0 %v193
        %197 = vmatprep.subr.mxu0 0.0
        %198 = vmatpush1.xpose.msra.mxu0 %v190
        %199 = vmatprep.subr.mxu0 0.0
        %200 = vmatpush1.xpose.msra.mxu0 %v187
        %201 = vmatprep.subr.mxu0 0.0
        %202 = vmatpush1.xpose.msra.mxu0 %v184
        %203 = vmatprep.subr.mxu0 0.0
        %204 = vmatpush1.xpose.msra.mxu0 %v181
        %205 = vmatprep.subr.mxu0 0.0
        %206 = vmatpush1.xpose.msra.mxu0 %v178
        %207 = vmatprep.subr.mxu0 0.0
        %208 = vmatpush1.xpose.msra.mxu0 %v175
        %209 = vmatprep.subr.mxu0 0.0
        %210 = vmatpush1.xpose.msra.mxu0 %v172
        %211 = vmatprep.subr.mxu0 0.0
        %212 = vmatpush1.xpose.msra.mxu0 %v169
        %213 = vmatprep.subr.mxu0 0.0
        %214 = vmatpush1.xpose.msra.mxu0 %v166
        %215 = vmatprep.subr.mxu0 0.0
        %216 = vmatpush1.xpose.msra.mxu0 %v163
        %217 = vmatprep.subr.mxu0 0.0
        %218 = vmatpush1.xpose.msra.mxu0 %v160
        %219 = vmatprep.subr.mxu0 0.0
        %220 = vmatpush1.xpose.msra.mxu0 %v157
        %221 = vmatprep.subr.mxu0 0.0
        %222 = vmatpush1.xpose.msra.mxu0 %v154
        %223 = vmatprep.subr.mxu0 0.0
        %224 = vmatpush1.xpose.msra.mxu0 %v151
        %225 = vmatprep.subr.mxu0 0.0
        %226 = vmatpush1.xpose.msra.mxu0 %v148
        %227 = vmatprep.subr.mxu0 0.0
        %228 = vmatpush2.xpose.msra.mxu0 0.0
        %229 = vmatprep.subr.mxu0 0.0
        %230 = vmatpush2.xpose.msra.mxu0 0.0
        %231 = vmatprep.subr.mxu0 0.0
        %232 = vmatpush2.xpose.msra.mxu0 0.0
        %233 = vmatprep.subr.mxu0 0.0
        %234 = vmatpush2.xpose.msra.mxu0 0.0
        %235 = vmatprep.subr.mxu0 0.0
        %236 = vmatpush2.xpose.msra.mxu0 0.0
        %237 = vmatprep.subr.mxu0 0.0
        %238 = vmatpush2.xpose.msra.mxu0 0.0
        %239 = vmatprep.subr.mxu0 0.0
        %240 = vmatpush2.xpose.msra.mxu0 0.0
        %241 = vmatprep.subr.mxu0 0.0
        %242 = vmatpush2.xpose.msra.mxu0 0.0
        %243 = vmatprep.subr.mxu0 0.0
        %244 = vmatpush2.xpose.msra.mxu0 0.0
        %245 = vmatprep.subr.mxu0 0.0
        %246 = vmatpush2.xpose.msra.mxu0 0.0
        %247 = vmatprep.subr.mxu0 0.0
        %248 = vmatpush2.xpose.msra.mxu0 0.0
        %249 = vmatprep.subr.mxu0 0.0
        %250 = vmatpush2.xpose.msra.mxu0 0.0
        %251 = vmatprep.subr.mxu0 0.0
        %252 = vmatpush2.xpose.msra.mxu0 0.0
        %253 = vmatprep.subr.mxu0 0.0
        %254 = vmatpush2.xpose.msra.mxu0 0.0
        %255 = vmatprep.subr.mxu0 0.0
        %256 = vmatpush2.xpose.msra.mxu0 0.0
        %257 = vmatprep.subr.mxu0 0.0
        %258 = vmatpush2.xpose.msra.mxu0 0.0
        %259 = vmatprep.mubr.f32.mxu0 0.0
        %260 = vmatmul.mubr.f32.gmra.mxu0 %v124
        %v261 = vpop.f32.mrf.mxu0
        %v262 = vadd.f32 0.0, %v261
        %v263 = vpop.f32.mrf.mxu0
        %264 = vmatprep.mubr.f32.mxu0 0.0
        %265 = vmatmul.mubr.f32.gmra.mxu0 %v127
        %v266 = vpop.f32.mrf.mxu0
        %v267 = vadd.f32 0.0, %v266
        %v268 = vpop.f32.mrf.mxu0
        %269 = vmatprep.mubr.f32.mxu0 0.0
        %270 = vmatmul.mubr.f32.gmra.mxu0 %v130
        %v271 = vpop.f32.mrf.mxu0
        %v272 = vadd.f32 0.0, %v271
        %v273 = vpop.f32.mrf.mxu0
        %274 = vmatprep.mubr.f32.mxu0 0.0
        %275 = vmatmul.mubr.f32.gmra.mxu0 %v133
        %v276 = vpop.f32.mrf.mxu0
        %v277 = vadd.f32 0.0, %v276
        %v278 = vpop.f32.mrf.mxu0
        %279 = vmatprep.mubr.f32.mxu0 0.0
        %280 = vmatmul.mubr.f32.gmra.mxu0 %v136
        %v281 = vpop.f32.mrf.mxu0
        %v282 = vadd.f32 0.0, %v281
        %v283 = vpop.f32.mrf.mxu0
        %284 = vmatprep.mubr.f32.mxu0 0.0
        %285 = vmatmul.mubr.f32.gmra.mxu0 %v139
        %v286 = vpop.f32.mrf.mxu0
        %v287 = vadd.f32 0.0, %v286
        %v288 = vpop.f32.mrf.mxu0
        %289 = vmatprep.mubr.f32.mxu0 0.0
        %290 = vmatmul.mubr.f32.gmra.mxu0 %v142
        %v291 = vpop.f32.mrf.mxu0
        %v292 = vadd.f32 0.0, %v291
        %v293 = vpop.f32.mrf.mxu0
        %294 = vmatprep.mubr.f32.mxu0 0.0
        %295 = vmatmul.mubr.f32.gmra.mxu0 %v145
        %v296 = vpop.f32.mrf.mxu0
        %v297 = vadd.f32 0.0, %v296
        %v298 = vpop.f32.mrf.mxu0
        %299 = vdwg.mxu0
        %v300 = vmul.f32 %v262, 3.0
        %v301 = vmul.f32 %v267, 3.0
        %v302 = vmul.f32 %v272, 3.0
        %v303 = vmul.f32 %v277, 3.0
        %v304 = vmul.f32 %v282, 3.0
        %v305 = vmul.f32 %v287, 3.0
        %v306 = vmul.f32 %v292, 3.0
        %v307 = vmul.f32 %v297, 3.0
        %v308 = vtanh.pop %v300
        %v309 = vtanh.pop %v301
        %v310 = vtanh.pop %v302
        %v311 = vtanh.pop %v303
        %v312 = vtanh.pop %v304
        %v313 = vtanh.pop %v305
        %v314 = vtanh.pop %v306
        %v315 = vtanh.pop %v307
        %v316 = vmax.f32 %v308, 0.0
        %v317 = vmax.f32 %v309, 0.0
        %v318 = vmax.f32 %v310, 0.0
        %v319 = vmax.f32 %v311, 0.0
        %v320 = vmax.f32 %v312, 0.0
        %v321 = vmax.f32 %v313, 0.0
        %v322 = vmax.f32 %v314, 0.0
        %v323 = vmax.f32 %v315, 0.0
        %v324 = vlaneseq
        %v325 = vand.u32 %v324, 127
        %vm326 = vcmp.lt.s32.totalorder %v325, 8
        %v327 = vsel %vm326, 1, 0
        %vm328 = vcmp.eq.s32.totalorder %v327, 1
        %v329 = vsel %vm328, %v316, -inf
        %v330 = vsel %vm328, %v317, -inf
        %v331 = vsel %vm328, %v318, -inf
        %v332 = vsel %vm328, %v319, -inf
        %v333 = vsel %vm328, %v320, -inf
        %v334 = vsel %vm328, %v321, -inf
        %v335 = vsel %vm328, %v322, -inf
        %v336 = vsel %vm328, %v323, -inf
        %337 = vmax.xlane.f32.xlu0 %v329
        %v338 = vpop.xlane.xlu0 %337
        %339 = vmax.xlane.f32.xlu0 %v330
        %v340 = vpop.xlane.xlu0 %339
        %341 = vmax.xlane.f32.xlu0 %v331
        %v342 = vpop.xlane.xlu0 %341
        %343 = vmax.xlane.f32.xlu0 %v332
        %v344 = vpop.xlane.xlu0 %343
        %345 = vmax.xlane.f32.xlu0 %v333
        %v346 = vpop.xlane.xlu0 %345
        %347 = vmax.xlane.f32.xlu0 %v334
        %v348 = vpop.xlane.xlu0 %347
        %349 = vmax.xlane.f32.xlu0 %v335
        %v350 = vpop.xlane.xlu0 %349
        %351 = vmax.xlane.f32.xlu0 %v336
        %v352 = vpop.xlane.xlu0 %351
        %vm353 = vcmp.eq.f32.partialorder %v329, %v338
        %vm354 = vcmp.eq.f32.partialorder %v330, %v340
        %vm355 = vcmp.eq.f32.partialorder %v331, %v342
        %vm356 = vcmp.eq.f32.partialorder %v332, %v344
        %vm357 = vcmp.eq.f32.partialorder %v333, %v346
        %vm358 = vcmp.eq.f32.partialorder %v334, %v348
        %vm359 = vcmp.eq.f32.partialorder %v335, %v350
        %vm360 = vcmp.eq.f32.partialorder %v336, %v352
        %v361 = vsel %vm353, %v325, 128
        %v362 = vsel %vm354, %v325, 128
        %v363 = vsel %vm355, %v325, 128
        %v364 = vsel %vm356, %v325, 128
        %v365 = vsel %vm357, %v325, 128
        %v366 = vsel %vm358, %v325, 128
        %v367 = vsel %vm359, %v325, 128
        %v368 = vsel %vm360, %v325, 128
        %v369 = vand.u32 %v361, 65535
        %v370 = vshra.s32 %v361, 16
        %v371 = vcvt.s32.f32 %v369
        %v372 = vcvt.s32.f32 %v370
        %373 = vmin.xlane.f32.xlu0 %v372
        %v374 = vpop.xlane.xlu0 %373
        %vm375 = vcmp.eq.f32.partialorder %v372, %v374
        %v376 = vsel %vm375, %v371, inf
        %377 = vmin.xlane.f32.xlu0 %v376
        %v378 = vpop.xlane.xlu0 %377
        %v379 = vcvt.f32.s32 %v378
        %v380 = vcvt.f32.s32 %v374
        %v381 = vshll.u32 %v380, 16
        %v382 = vadd.s32 %v381, %v379
        %v383 = vand.u32 %v362, 65535
        %v384 = vshra.s32 %v362, 16
        %v385 = vcvt.s32.f32 %v383
        %v386 = vcvt.s32.f32 %v384
        %387 = vmin.xlane.f32.xlu0 %v386
        %v388 = vpop.xlane.xlu0 %387
        %vm389 = vcmp.eq.f32.partialorder %v386, %v388
        %v390 = vsel %vm389, %v385, inf
        %391 = vmin.xlane.f32.xlu0 %v390
        %v392 = vpop.xlane.xlu0 %391
        %v393 = vcvt.f32.s32 %v392
        %v394 = vcvt.f32.s32 %v388
        %v395 = vshll.u32 %v394, 16
        %v396 = vadd.s32 %v395, %v393
        %v397 = vand.u32 %v363, 65535
        %v398 = vshra.s32 %v363, 16
        %v399 = vcvt.s32.f32 %v397
        %v400 = vcvt.s32.f32 %v398
        %401 = vmin.xlane.f32.xlu0 %v400
        %v402 = vpop.xlane.xlu0 %401
        %vm403 = vcmp.eq.f32.partialorder %v400, %v402
        %v404 = vsel %vm403, %v399, inf
        %405 = vmin.xlane.f32.xlu0 %v404
        %v406 = vpop.xlane.xlu0 %405
        %v407 = vcvt.f32.s32 %v406
        %v408 = vcvt.f32.s32 %v402
        %v409 = vshll.u32 %v408, 16
        %v410 = vadd.s32 %v409, %v407
        %v411 = vand.u32 %v364, 65535
        %v412 = vshra.s32 %v364, 16
        %v413 = vcvt.s32.f32 %v411
        %v414 = vcvt.s32.f32 %v412
        %415 = vmin.xlane.f32.xlu0 %v414
        %v416 = vpop.xlane.xlu0 %415
        %vm417 = vcmp.eq.f32.partialorder %v414, %v416
        %v418 = vsel %vm417, %v413, inf
        %419 = vmin.xlane.f32.xlu0 %v418
        %v420 = vpop.xlane.xlu0 %419
        %v421 = vcvt.f32.s32 %v420
        %v422 = vcvt.f32.s32 %v416
        %v423 = vshll.u32 %v422, 16
        %v424 = vadd.s32 %v423, %v421
        %v425 = vand.u32 %v365, 65535
        %v426 = vshra.s32 %v365, 16
        %v427 = vcvt.s32.f32 %v425
        %v428 = vcvt.s32.f32 %v426
        %429 = vmin.xlane.f32.xlu0 %v428
        %v430 = vpop.xlane.xlu0 %429
        %vm431 = vcmp.eq.f32.partialorder %v428, %v430
        %v432 = vsel %vm431, %v427, inf
        %433 = vmin.xlane.f32.xlu0 %v432
        %v434 = vpop.xlane.xlu0 %433
        %v435 = vcvt.f32.s32 %v434
        %v436 = vcvt.f32.s32 %v430
        %v437 = vshll.u32 %v436, 16
        %v438 = vadd.s32 %v437, %v435
        %v439 = vand.u32 %v366, 65535
        %v440 = vshra.s32 %v366, 16
        %v441 = vcvt.s32.f32 %v439
        %v442 = vcvt.s32.f32 %v440
        %443 = vmin.xlane.f32.xlu0 %v442
        %v444 = vpop.xlane.xlu0 %443
        %vm445 = vcmp.eq.f32.partialorder %v442, %v444
        %v446 = vsel %vm445, %v441, inf
        %447 = vmin.xlane.f32.xlu0 %v446
        %v448 = vpop.xlane.xlu0 %447
        %v449 = vcvt.f32.s32 %v448
        %v450 = vcvt.f32.s32 %v444
        %v451 = vshll.u32 %v450, 16
        %v452 = vadd.s32 %v451, %v449
        %v453 = vand.u32 %v367, 65535
        %v454 = vshra.s32 %v367, 16
        %v455 = vcvt.s32.f32 %v453
        %v456 = vcvt.s32.f32 %v454
        %457 = vmin.xlane.f32.xlu0 %v456
        %v458 = vpop.xlane.xlu0 %457
        %vm459 = vcmp.eq.f32.partialorder %v456, %v458
        %v460 = vsel %vm459, %v455, inf
        %461 = vmin.xlane.f32.xlu0 %v460
        %v462 = vpop.xlane.xlu0 %461
        %v463 = vcvt.f32.s32 %v462
        %v464 = vcvt.f32.s32 %v458
        %v465 = vshll.u32 %v464, 16
        %v466 = vadd.s32 %v465, %v463
        %v467 = vand.u32 %v368, 65535
        %v468 = vshra.s32 %v368, 16
        %v469 = vcvt.s32.f32 %v467
        %v470 = vcvt.s32.f32 %v468
        %471 = vmin.xlane.f32.xlu0 %v470
        %v472 = vpop.xlane.xlu0 %471
        %vm473 = vcmp.eq.f32.partialorder %v470, %v472
        %v474 = vsel %vm473, %v469, inf
        %475 = vmin.xlane.f32.xlu0 %v474
        %v476 = vpop.xlane.xlu0 %475
        %v477 = vcvt.f32.s32 %v476
        %v478 = vcvt.f32.s32 %v472
        %v479 = vshll.u32 %v478, 16
        %v480 = vadd.s32 %v479, %v477
        %vm481 = vcmp.eq.s32.totalorder %v325, %v382
        %vm482 = vcmp.eq.s32.totalorder %v325, %v396
        %vm483 = vcmp.eq.s32.totalorder %v325, %v410
        %vm484 = vcmp.eq.s32.totalorder %v325, %v424
        %vm485 = vcmp.eq.s32.totalorder %v325, %v438
        %vm486 = vcmp.eq.s32.totalorder %v325, %v452
        %vm487 = vcmp.eq.s32.totalorder %v325, %v466
        %vm488 = vcmp.eq.s32.totalorder %v325, %v480
        %v489 = vsel %vm481, -inf, %v329
        %v490 = vsel %vm482, -inf, %v330
        %v491 = vsel %vm483, -inf, %v331
        %v492 = vsel %vm484, -inf, %v332
        %v493 = vsel %vm485, -inf, %v333
        %v494 = vsel %vm486, -inf, %v334
        %v495 = vsel %vm487, -inf, %v335
        %v496 = vsel %vm488, -inf, %v336
        %497 = vmax.xlane.f32.xlu0 %v489
        %v498 = vpop.xlane.xlu0 %497
        %499 = vmax.xlane.f32.xlu0 %v490
        %v500 = vpop.xlane.xlu0 %499
        %501 = vmax.xlane.f32.xlu0 %v491
        %v502 = vpop.xlane.xlu0 %501
        %503 = vmax.xlane.f32.xlu0 %v492
        %v504 = vpop.xlane.xlu0 %503
        %505 = vmax.xlane.f32.xlu0 %v493
        %v506 = vpop.xlane.xlu0 %505
        %507 = vmax.xlane.f32.xlu0 %v494
        %v508 = vpop.xlane.xlu0 %507
        %509 = vmax.xlane.f32.xlu0 %v495
        %v510 = vpop.xlane.xlu0 %509
        %511 = vmax.xlane.f32.xlu0 %v496
        %v512 = vpop.xlane.xlu0 %511
        %vm513 = vcmp.eq.f32.partialorder %v489, %v498
        %vm514 = vcmp.eq.f32.partialorder %v490, %v500
        %vm515 = vcmp.eq.f32.partialorder %v491, %v502
        %vm516 = vcmp.eq.f32.partialorder %v492, %v504
        %vm517 = vcmp.eq.f32.partialorder %v493, %v506
        %vm518 = vcmp.eq.f32.partialorder %v494, %v508
        %vm519 = vcmp.eq.f32.partialorder %v495, %v510
        %vm520 = vcmp.eq.f32.partialorder %v496, %v512
        %v521 = vsel %vm513, %v325, 128
        %v522 = vsel %vm514, %v325, 128
        %v523 = vsel %vm515, %v325, 128
        %v524 = vsel %vm516, %v325, 128
        %v525 = vsel %vm517, %v325, 128
        %v526 = vsel %vm518, %v325, 128
        %v527 = vsel %vm519, %v325, 128
        %v528 = vsel %vm520, %v325, 128
        %v529 = vand.u32 %v521, 65535
        %v530 = vshra.s32 %v521, 16
        %v531 = vcvt.s32.f32 %v529
        %v532 = vcvt.s32.f32 %v530
        %533 = vmin.xlane.f32.xlu0 %v532
        %v534 = vpop.xlane.xlu0 %533
        %vm535 = vcmp.eq.f32.partialorder %v532, %v534
        %v536 = vsel %vm535, %v531, inf
        %537 = vmin.xlane.f32.xlu0 %v536
        %v538 = vpop.xlane.xlu0 %537
        %v539 = vcvt.f32.s32 %v538
        %v540 = vcvt.f32.s32 %v534
        %v541 = vshll.u32 %v540, 16
        %v542 = vadd.s32 %v541, %v539
        %v543 = vand.u32 %v522, 65535
        %v544 = vshra.s32 %v522, 16
        %v545 = vcvt.s32.f32 %v543
        %v546 = vcvt.s32.f32 %v544
        %547 = vmin.xlane.f32.xlu0 %v546
        %v548 = vpop.xlane.xlu0 %547
        %vm549 = vcmp.eq.f32.partialorder %v546, %v548
        %v550 = vsel %vm549, %v545, inf
        %551 = vmin.xlane.f32.xlu0 %v550
        %v552 = vpop.xlane.xlu0 %551
        %v553 = vcvt.f32.s32 %v552
        %v554 = vcvt.f32.s32 %v548
        %v555 = vshll.u32 %v554, 16
        %v556 = vadd.s32 %v555, %v553
        %v557 = vand.u32 %v523, 65535
        %v558 = vshra.s32 %v523, 16
        %v559 = vcvt.s32.f32 %v557
        %v560 = vcvt.s32.f32 %v558
        %561 = vmin.xlane.f32.xlu0 %v560
        %v562 = vpop.xlane.xlu0 %561
        %vm563 = vcmp.eq.f32.partialorder %v560, %v562
        %v564 = vsel %vm563, %v559, inf
        %565 = vmin.xlane.f32.xlu0 %v564
        %v566 = vpop.xlane.xlu0 %565
        %v567 = vcvt.f32.s32 %v566
        %v568 = vcvt.f32.s32 %v562
        %v569 = vshll.u32 %v568, 16
        %v570 = vadd.s32 %v569, %v567
        %v571 = vand.u32 %v524, 65535
        %v572 = vshra.s32 %v524, 16
        %v573 = vcvt.s32.f32 %v571
        %v574 = vcvt.s32.f32 %v572
        %575 = vmin.xlane.f32.xlu0 %v574
        %v576 = vpop.xlane.xlu0 %575
        %vm577 = vcmp.eq.f32.partialorder %v574, %v576
        %v578 = vsel %vm577, %v573, inf
        %579 = vmin.xlane.f32.xlu0 %v578
        %v580 = vpop.xlane.xlu0 %579
        %v581 = vcvt.f32.s32 %v580
        %v582 = vcvt.f32.s32 %v576
        %v583 = vshll.u32 %v582, 16
        %v584 = vadd.s32 %v583, %v581
        %v585 = vand.u32 %v525, 65535
        %v586 = vshra.s32 %v525, 16
        %v587 = vcvt.s32.f32 %v585
        %v588 = vcvt.s32.f32 %v586
        %589 = vmin.xlane.f32.xlu0 %v588
        %v590 = vpop.xlane.xlu0 %589
        %vm591 = vcmp.eq.f32.partialorder %v588, %v590
        %v592 = vsel %vm591, %v587, inf
        %593 = vmin.xlane.f32.xlu0 %v592
        %v594 = vpop.xlane.xlu0 %593
        %v595 = vcvt.f32.s32 %v594
        %v596 = vcvt.f32.s32 %v590
        %v597 = vshll.u32 %v596, 16
        %v598 = vadd.s32 %v597, %v595
        %v599 = vand.u32 %v526, 65535
        %v600 = vshra.s32 %v526, 16
        %v601 = vcvt.s32.f32 %v599
        %v602 = vcvt.s32.f32 %v600
        %603 = vmin.xlane.f32.xlu0 %v602
        %v604 = vpop.xlane.xlu0 %603
        %vm605 = vcmp.eq.f32.partialorder %v602, %v604
        %v606 = vsel %vm605, %v601, inf
        %607 = vmin.xlane.f32.xlu0 %v606
        %v608 = vpop.xlane.xlu0 %607
        %v609 = vcvt.f32.s32 %v608
        %v610 = vcvt.f32.s32 %v604
        %v611 = vshll.u32 %v610, 16
        %v612 = vadd.s32 %v611, %v609
        %v613 = vand.u32 %v527, 65535
        %v614 = vshra.s32 %v527, 16
        %v615 = vcvt.s32.f32 %v613
        %v616 = vcvt.s32.f32 %v614
        %617 = vmin.xlane.f32.xlu0 %v616
        %v618 = vpop.xlane.xlu0 %617
        %vm619 = vcmp.eq.f32.partialorder %v616, %v618
        %v620 = vsel %vm619, %v615, inf
        %621 = vmin.xlane.f32.xlu0 %v620
        %v622 = vpop.xlane.xlu0 %621
        %v623 = vcvt.f32.s32 %v622
        %v624 = vcvt.f32.s32 %v618
        %v625 = vshll.u32 %v624, 16
        %v626 = vadd.s32 %v625, %v623
        %v627 = vand.u32 %v528, 65535
        %v628 = vshra.s32 %v528, 16
        %v629 = vcvt.s32.f32 %v627
        %v630 = vcvt.s32.f32 %v628
        %631 = vmin.xlane.f32.xlu0 %v630
        %v632 = vpop.xlane.xlu0 %631
        %vm633 = vcmp.eq.f32.partialorder %v630, %v632
        %v634 = vsel %vm633, %v629, inf
        %635 = vmin.xlane.f32.xlu0 %v634
        %v636 = vpop.xlane.xlu0 %635
        %v637 = vcvt.f32.s32 %v636
        %v638 = vcvt.f32.s32 %v632
        %v639 = vshll.u32 %v638, 16
        %v640 = vadd.s32 %v639, %v637
        %vm641 = vcmp.eq.s32.totalorder %v325, %v542
        %vm642 = vcmp.eq.s32.totalorder %v325, %v556
        %vm643 = vcmp.eq.s32.totalorder %v325, %v570
        %vm644 = vcmp.eq.s32.totalorder %v325, %v584
        %vm645 = vcmp.eq.s32.totalorder %v325, %v598
        %vm646 = vcmp.eq.s32.totalorder %v325, %v612
        %vm647 = vcmp.eq.s32.totalorder %v325, %v626
        %vm648 = vcmp.eq.s32.totalorder %v325, %v640
        %v649 = vsel %vm641, -inf, %v489
        %v650 = vsel %vm642, -inf, %v490
        %v651 = vsel %vm643, -inf, %v491
        %v652 = vsel %vm644, -inf, %v492
        %v653 = vsel %vm645, -inf, %v493
        %v654 = vsel %vm646, -inf, %v494
        %v655 = vsel %vm647, -inf, %v495
        %v656 = vsel %vm648, -inf, %v496
        %657 = vmax.xlane.f32.xlu0 %v649
        %v658 = vpop.xlane.xlu0 %657
        %659 = vmax.xlane.f32.xlu0 %v650
        %v660 = vpop.xlane.xlu0 %659
        %661 = vmax.xlane.f32.xlu0 %v651
        %v662 = vpop.xlane.xlu0 %661
        %663 = vmax.xlane.f32.xlu0 %v652
        %v664 = vpop.xlane.xlu0 %663
        %665 = vmax.xlane.f32.xlu0 %v653
        %v666 = vpop.xlane.xlu0 %665
        %667 = vmax.xlane.f32.xlu0 %v654
        %v668 = vpop.xlane.xlu0 %667
        %669 = vmax.xlane.f32.xlu0 %v655
        %v670 = vpop.xlane.xlu0 %669
        %671 = vmax.xlane.f32.xlu0 %v656
        %v672 = vpop.xlane.xlu0 %671
        %vm673 = vcmp.eq.f32.partialorder %v649, %v658
        %vm674 = vcmp.eq.f32.partialorder %v650, %v660
        %vm675 = vcmp.eq.f32.partialorder %v651, %v662
        %vm676 = vcmp.eq.f32.partialorder %v652, %v664
        %vm677 = vcmp.eq.f32.partialorder %v653, %v666
        %vm678 = vcmp.eq.f32.partialorder %v654, %v668
        %vm679 = vcmp.eq.f32.partialorder %v655, %v670
        %vm680 = vcmp.eq.f32.partialorder %v656, %v672
        %v681 = vsel %vm673, %v325, 128
        %v682 = vsel %vm674, %v325, 128
        %v683 = vsel %vm675, %v325, 128
        %v684 = vsel %vm676, %v325, 128
        %v685 = vsel %vm677, %v325, 128
        %v686 = vsel %vm678, %v325, 128
        %v687 = vsel %vm679, %v325, 128
        %v688 = vsel %vm680, %v325, 128
        %v689 = vand.u32 %v681, 65535
        %v690 = vshra.s32 %v681, 16
        %v691 = vcvt.s32.f32 %v689
        %v692 = vcvt.s32.f32 %v690
        %693 = vmin.xlane.f32.xlu0 %v692
        %v694 = vpop.xlane.xlu0 %693
        %vm695 = vcmp.eq.f32.partialorder %v692, %v694
        %v696 = vsel %vm695, %v691, inf
        %697 = vmin.xlane.f32.xlu0 %v696
        %v698 = vpop.xlane.xlu0 %697
        %v699 = vcvt.f32.s32 %v698
        %v700 = vcvt.f32.s32 %v694
        %v701 = vshll.u32 %v700, 16
        %v702 = vadd.s32 %v701, %v699
        %v703 = vand.u32 %v682, 65535
        %v704 = vshra.s32 %v682, 16
        %v705 = vcvt.s32.f32 %v703
        %v706 = vcvt.s32.f32 %v704
        %707 = vmin.xlane.f32.xlu0 %v706
        %v708 = vpop.xlane.xlu0 %707
        %vm709 = vcmp.eq.f32.partialorder %v706, %v708
        %v710 = vsel %vm709, %v705, inf
        %711 = vmin.xlane.f32.xlu0 %v710
        %v712 = vpop.xlane.xlu0 %711
        %v713 = vcvt.f32.s32 %v712
        %v714 = vcvt.f32.s32 %v708
        %v715 = vshll.u32 %v714, 16
        %v716 = vadd.s32 %v715, %v713
        %v717 = vand.u32 %v683, 65535
        %v718 = vshra.s32 %v683, 16
        %v719 = vcvt.s32.f32 %v717
        %v720 = vcvt.s32.f32 %v718
        %721 = vmin.xlane.f32.xlu0 %v720
        %v722 = vpop.xlane.xlu0 %721
        %vm723 = vcmp.eq.f32.partialorder %v720, %v722
        %v724 = vsel %vm723, %v719, inf
        %725 = vmin.xlane.f32.xlu0 %v724
        %v726 = vpop.xlane.xlu0 %725
        %v727 = vcvt.f32.s32 %v726
        %v728 = vcvt.f32.s32 %v722
        %v729 = vshll.u32 %v728, 16
        %v730 = vadd.s32 %v729, %v727
        %v731 = vand.u32 %v684, 65535
        %v732 = vshra.s32 %v684, 16
        %v733 = vcvt.s32.f32 %v731
        %v734 = vcvt.s32.f32 %v732
        %735 = vmin.xlane.f32.xlu0 %v734
        %v736 = vpop.xlane.xlu0 %735
        %vm737 = vcmp.eq.f32.partialorder %v734, %v736
        %v738 = vsel %vm737, %v733, inf
        %739 = vmin.xlane.f32.xlu0 %v738
        %v740 = vpop.xlane.xlu0 %739
        %v741 = vcvt.f32.s32 %v740
        %v742 = vcvt.f32.s32 %v736
        %v743 = vshll.u32 %v742, 16
        %v744 = vadd.s32 %v743, %v741
        %v745 = vand.u32 %v685, 65535
        %v746 = vshra.s32 %v685, 16
        %v747 = vcvt.s32.f32 %v745
        %v748 = vcvt.s32.f32 %v746
        %749 = vmin.xlane.f32.xlu0 %v748
        %v750 = vpop.xlane.xlu0 %749
        %vm751 = vcmp.eq.f32.partialorder %v748, %v750
        %v752 = vsel %vm751, %v747, inf
        %753 = vmin.xlane.f32.xlu0 %v752
        %v754 = vpop.xlane.xlu0 %753
        %v755 = vcvt.f32.s32 %v754
        %v756 = vcvt.f32.s32 %v750
        %v757 = vshll.u32 %v756, 16
        %v758 = vadd.s32 %v757, %v755
        %v759 = vand.u32 %v686, 65535
        %v760 = vshra.s32 %v686, 16
        %v761 = vcvt.s32.f32 %v759
        %v762 = vcvt.s32.f32 %v760
        %763 = vmin.xlane.f32.xlu0 %v762
        %v764 = vpop.xlane.xlu0 %763
        %vm765 = vcmp.eq.f32.partialorder %v762, %v764
        %v766 = vsel %vm765, %v761, inf
        %767 = vmin.xlane.f32.xlu0 %v766
        %v768 = vpop.xlane.xlu0 %767
        %v769 = vcvt.f32.s32 %v768
        %v770 = vcvt.f32.s32 %v764
        %v771 = vshll.u32 %v770, 16
        %v772 = vadd.s32 %v771, %v769
        %v773 = vand.u32 %v687, 65535
        %v774 = vshra.s32 %v687, 16
        %v775 = vcvt.s32.f32 %v773
        %v776 = vcvt.s32.f32 %v774
        %777 = vmin.xlane.f32.xlu0 %v776
        %v778 = vpop.xlane.xlu0 %777
        %vm779 = vcmp.eq.f32.partialorder %v776, %v778
        %v780 = vsel %vm779, %v775, inf
        %781 = vmin.xlane.f32.xlu0 %v780
        %v782 = vpop.xlane.xlu0 %781
        %v783 = vcvt.f32.s32 %v782
        %v784 = vcvt.f32.s32 %v778
        %v785 = vshll.u32 %v784, 16
        %v786 = vadd.s32 %v785, %v783
        %v787 = vand.u32 %v688, 65535
        %v788 = vshra.s32 %v688, 16
        %v789 = vcvt.s32.f32 %v787
        %v790 = vcvt.s32.f32 %v788
        %791 = vmin.xlane.f32.xlu0 %v790
        %v792 = vpop.xlane.xlu0 %791
        %vm793 = vcmp.eq.f32.partialorder %v790, %v792
        %v794 = vsel %vm793, %v789, inf
        %795 = vmin.xlane.f32.xlu0 %v794
        %v796 = vpop.xlane.xlu0 %795
        %v797 = vcvt.f32.s32 %v796
        %v798 = vcvt.f32.s32 %v792
        %v799 = vshll.u32 %v798, 16
        %v800 = vadd.s32 %v799, %v797
        %vm801 = vcmp.eq.s32.totalorder %v325, %v702
        %vm802 = vcmp.eq.s32.totalorder %v325, %v716
        %vm803 = vcmp.eq.s32.totalorder %v325, %v730
        %vm804 = vcmp.eq.s32.totalorder %v325, %v744
        %vm805 = vcmp.eq.s32.totalorder %v325, %v758
        %vm806 = vcmp.eq.s32.totalorder %v325, %v772
        %vm807 = vcmp.eq.s32.totalorder %v325, %v786
        %vm808 = vcmp.eq.s32.totalorder %v325, %v800
        %v809 = vsel %vm801, -inf, %v649
        %v810 = vsel %vm802, -inf, %v650
        %v811 = vsel %vm803, -inf, %v651
        %v812 = vsel %vm804, -inf, %v652
        %v813 = vsel %vm805, -inf, %v653
        %v814 = vsel %vm806, -inf, %v654
        %v815 = vsel %vm807, -inf, %v655
        %v816 = vsel %vm808, -inf, %v656
        %vm817 = vcmp.eq.f32.partialorder %v809, -inf
        %vm818 = vcmp.eq.f32.partialorder %v810, -inf
        %vm819 = vcmp.eq.f32.partialorder %v811, -inf
        %vm820 = vcmp.eq.f32.partialorder %v812, -inf
        %vm821 = vcmp.eq.f32.partialorder %v813, -inf
        %vm822 = vcmp.eq.f32.partialorder %v814, -inf
        %vm823 = vcmp.eq.f32.partialorder %v815, -inf
        %vm824 = vcmp.eq.f32.partialorder %v816, -inf
        %v825 = vsel %vm817, %v316, 0.0
        %v826 = vsel %vm818, %v317, 0.0
        %v827 = vsel %vm819, %v318, 0.0
        %v828 = vsel %vm820, %v319, 0.0
        %v829 = vsel %vm821, %v320, 0.0
        %v830 = vsel %vm822, %v321, 0.0
        %v831 = vsel %vm823, %v322, 0.0
        %v832 = vsel %vm824, %v323, 0.0
        %833 = vst [vmem:[%s94] sm:$0xff] %v825
        %834 = vst [vmem:[%s94 + $0x8] sm:$0xff] %v826
        %835 = vst [vmem:[%s94 + $0x10] sm:$0xff] %v827
        %836 = vst [vmem:[%s94 + $0x18] sm:$0xff] %v828
        %837 = vst [vmem:[%s94 + $0x20] sm:$0xff] %v829
        %838 = vst [vmem:[%s94 + $0x28] sm:$0xff] %v830
        %839 = vst [vmem:[%s94 + $0x30] sm:$0xff] %v831
        %840 = vst [vmem:[%s94 + $0x38] sm:$0xff] %v832
        %s841 = sand.u32 %s44, 1
        %s842 = scalar_lea.sflag [#allocation3], %s841
        %s843 = sand.u32 %s44, 1
        %s844 = smul.addr %s843, 64
        %s845 = scalar_lea.vmem [#allocation2], %s844
        // Predicated region
        $region25: #{tpu_custom_call.1} parent=23 // pred_check
          %p846 = pneg %p54
        $region26: #{tpu_custom_call.1} parent=23 // pred_check_branch
          %848 = sbr.rel (%p846) target = $region28
        $region27: #{tpu_custom_call.1} parent=23 // pred_region
          %s849 = smul.u32 8, %s15
          %s851 = ssub.s32 1024, 1024
          %852 = vsyncadd %s842, %s851
          %s853 = smul.addr %s849, 128
          %s854 = scalar_lea.hbm %s1, %s853
          %s855 = sshll.u32 %s845, 4
          %s856 = int_to_ptr.vmem [resolvable:$true] %s855
          %861 = dma.vmem_to_hbm [thread:$0]  %s856, 1024, %s854, %s842, 128, 128, 8
        $region28: #{tpu_custom_call.1} parent=23 // pred_fallthru
          _
      $region24: #{tpu_custom_call.1} parent=5 // pred_fallthru
        _
      %p862 = scmp.le.s32.totalorder 2, %s10
      // Predicated region
      $region29: #{tpu_custom_call.1} parent=5 // pred_check
        %p863 = pneg %p862
      $region30: #{tpu_custom_call.1} parent=5 // pred_check_branch
        %865 = sbr.rel (%p863) target = $region32
      $region31: #{tpu_custom_call.1} parent=5 // pred_region
        %s866 = ssub.s32 %s10, 2
        // Predicated region
        $region33: #{tpu_custom_call.1} parent=31 // pred_check
          %p867 = pneg %p60
        $region34: #{tpu_custom_call.1} parent=31 // pred_check_branch
          %869 = sbr.rel (%p867) target = $region36
        $region35: #{tpu_custom_call.1} parent=31 // pred_region
          %s870 = sand.u32 %s45, 1
          %s871 = scalar_lea.sflag [#allocation3], %s870
          %s872 = sand.u32 %s45, 1
          %s873 = smul.addr %s872, 64
          %s874 = scalar_lea.vmem [#allocation2], %s873
          %875 = dma.done %s871, 1024
        $region36: #{tpu_custom_call.1} parent=31 // pred_fallthru
          _
      $region32: #{tpu_custom_call.1} parent=5 // pred_fallthru
        _
    $region6: #{tpu_custom_call.1} parent=1 // loop_footer
      %s14 = sadd.s32 1, %s10
    $region7: #{tpu_custom_call.1} parent=1 // loop_footer_branch
      %9 = sbr.rel target = $region3
    $region8: #{tpu_custom_call.1} parent=1 // loop_exit
      _
    %876 = vsyncpa [#allocation3], 1
    %s877 = scalar_lea.sflag [#allocation3], 1
    %878 = vsyncpa %s877, 1

</llo_original>
